<compile_context>
chip_gen: v7x
topology: tpu7x:2x2x1
jax: 0.10.0
libtpu: 0.0.40
codegen_flags: <defaults>
</compile_context>

<pallas_src>
import functools

import jax
import jax.numpy as jnp
import numpy as np
from jax.experimental import pallas as pl
from jax.experimental.pallas import tpu as pltpu


def _spoplus_cache_kernel(cp_ref, c_ref, w_ref, pool_t_ref, pool_g_ref,
                          loss_ref, sol_ref, *, p_valid, p_padded, precision):
    cp = cp_ref[...]            # (tb, Dp) f32  predicted cost
    c = c_ref[...]              # (tb, Dp) f32  true cost
    w = w_ref[...]              # (tb, Dp) f32  true optimal solution

    # (2*cp - c) @ pool_t on the MXU -- pool pre-transposed to (Dp, Pp) once
    # in the wrapper, no in-kernel relayout.
    q = 2.0 * cp - c
    obj_mat = jnp.dot(q, pool_t_ref[...], preferred_element_type=jnp.float32,
                      precision=precision)                        # (tb, Pp)

    ids = jax.lax.broadcasted_iota(jnp.int32, obj_mat.shape, 1)   # (tb, Pp)
    if p_valid < p_padded:
        # padded (all-zero) pool columns must never win the min
        obj_mat = jnp.where(ids < p_valid, obj_mat, jnp.inf)

    # MINIMIZE sense: first-occurrence argmin over the pool (matches np.argmin).
    obj_min = jnp.min(obj_mat, axis=1, keepdims=True)             # (tb, 1)
    first_idx = jnp.min(jnp.where(obj_mat == obj_min, ids, p_padded),
                        axis=1, keepdims=True)                    # (tb, 1)

    # gather sol = solpool[argmin] as a one-hot matmul on the MXU; bf16 x bf16
    # is exact for 0/1-valued pools.
    onehot = (ids == first_idx).astype(pool_g_ref.dtype)          # (tb, Pp)
    sol = jnp.dot(onehot, pool_g_ref[...],
                  preferred_element_type=jnp.float32)             # (tb, Dp) f32
    sol_ref[...] = sol.astype(sol_ref.dtype)

    # recompute the winning objective with an exact f32 elementwise dot so the
    # loss does not depend on the MXU matmul precision.
    obj = jnp.sum(q * sol, axis=1, keepdims=True)                 # (tb, 1)

    # partial loss: -obj + 2*<cp, w>; true_obj is subtracted in the wrapper.
    cw = jnp.sum(cp * w, axis=1, keepdims=True)                   # (tb, 1)
    loss_ref[...] = 2.0 * cw - obj


def _round_up(x, m):
    return ((x + m - 1) // m) * m


def _pad2d(x, rows, cols, dtype):
    x = x.astype(dtype)
    r, c = x.shape
    if (r, c) == (rows, cols):
        return x                        # skip the extra XLA read+write pass
    return jnp.zeros((rows, cols), dtype).at[:r, :c].set(x)


@functools.partial(jax.jit,
                   static_argnames=("tb", "exact_bf16_pool", "objective_precision"))
def spoplus_forward(pred_cost, true_cost, true_sol, true_obj, solpool, *,
                    tb=None, exact_bf16_pool=True, objective_precision=None):
    """SPO+ forward, solution-pool (cache) path, MINIMIZE sense.

    Returns (loss (B,) f32, sol (B, D)); sol is bfloat16 when
    exact_bf16_pool=True (bit-exact for 0/1-valued pools), float32 otherwise.
    """
    B, D = pred_cost.shape
    P, _ = solpool.shape
    f32 = jnp.float32

    # lane-pad to multiples of 128 (full-lane MXU/VPU work + dense stores)
    Dp = _round_up(D, 128)
    Pp = _round_up(P, 128)

    gather_dtype = jnp.bfloat16 if exact_bf16_pool else f32
    sol_dtype = jnp.bfloat16 if exact_bf16_pool else f32
    sol_bytes = 2 if exact_bf16_pool else 4
    pool_g_bytes = 2 if exact_bf16_pool else 4

    # --- generation-aware VMEM budget -> batch tile ------------------------
    vmem_cap = 128 * 2**20                      # v5e/v6e physical VMEM
    try:
        vmem_cap = int(pltpu.get_tpu_info().vmem_capacity_bytes)
    except Exception:
        pass                                    # conservative fallback
    usable = max(24 * 2**20, min(int(0.8 * vmem_cap), vmem_cap - 16 * 2**20))

    fixed = Dp * Pp * 4 + Pp * Dp * pool_g_bytes        # single-buffered pools
    per_row = (2 * 3 * Dp * 4                           # cp/c/w double-buffered
               + 2 * (Dp * sol_bytes + 4)               # sol/loss double-buffered
               + 6 * Pp * 4                             # obj_mat/ids/onehot temps
               + 2 * Dp * 4)                            # q / sol temporaries
    if tb is None:
        tb = max(16, (usable - fixed) // per_row)
        tb = min(512, tb, _round_up(B, 16))
    tb = max(16, _round_up(int(tb), 16))
    num_tiles = pl.cdiv(B, tb)    # grid is a serial loop on 1-TC chips: no forced >=2
    Bp = num_tiles * tb

    cp = _pad2d(pred_cost, Bp, Dp, f32)
    c = _pad2d(true_cost, Bp, Dp, f32)
    w = _pad2d(true_sol, Bp, Dp, f32)
    pool = _pad2d(solpool, Pp, Dp, f32)
    pool_t = pool.T                       # (Dp, Pp): one-time XLA transpose
    pool_g = pool.astype(gather_dtype)    # (Pp, Dp): gather operand

    vmem_est = int(fixed + per_row * tb)
    vmem_limit = int(min(usable, max(32 * 2**20, 2 * vmem_est)))

    kernel = functools.partial(_spoplus_cache_kernel, p_valid=P, p_padded=Pp,
                               precision=objective_precision)

    loss_col, sol_pad = pl.pallas_call(
        kernel,
        out_shape=(
            jax.ShapeDtypeStruct((Bp, 1), f32),
            jax.ShapeDtypeStruct((Bp, Dp), sol_dtype),
        ),
        grid_spec=pltpu.PrefetchScalarGridSpec(
            num_scalar_prefetch=0,
            grid=(num_tiles,),
            in_specs=[
                pl.BlockSpec((tb, Dp), lambda i: (i, 0)),   # pred_cost
                pl.BlockSpec((tb, Dp), lambda i: (i, 0)),   # true_cost
                pl.BlockSpec((tb, Dp), lambda i: (i, 0)),   # true_sol
                # resident pools: constant index_map -> single-buffer them
                pl.BlockSpec((Dp, Pp), lambda i: (0, 0),
                             pipeline_mode=pl.Buffered(1)),  # pool_t
                pl.BlockSpec((Pp, Dp), lambda i: (0, 0),
                             pipeline_mode=pl.Buffered(1)),  # pool_g
            ],
            out_specs=(
                pl.BlockSpec((tb, 1), lambda i: (i, 0)),    # partial loss
                pl.BlockSpec((tb, Dp), lambda i: (i, 0)),   # sol
            ),
        ),
        compiler_params=pltpu.CompilerParams(
            dimension_semantics=("parallel",),
            vmem_limit_bytes=vmem_limit,
        ),
    )(cp, c, w, pool_t, pool_g)

    loss = loss_col[:B, 0] - true_obj.reshape(B).astype(f32)
    sol = sol_pad[:B, :D]
    return loss, sol


def _reference_numpy(cp, c, w, z, solpool):
    cp, c, w, z, solpool = map(np.asarray, (cp, c, w, z, solpool))
    solpool_obj = (2 * cp - c) @ solpool.T
    ind = np.argmin(solpool_obj, axis=1)            # MINIMIZE
    obj = np.take_along_axis(solpool_obj, ind.reshape(-1, 1), axis=1).reshape(-1)
    sol = solpool[ind]
    loss = np.array([-obj[i] + 2 * np.dot(cp[i], w[i]) - z[i] for i in range(len(z))])
    return loss.astype(np.float32), sol.astype(np.float32)


if __name__ == "__main__":
    B, D, P = 8, 32, 64  # batch, cost-vector dim, solution-pool size

    key = jax.random.PRNGKey(0)
    k_cp, k_c, k_pool, k_pick = jax.random.split(key, 4)

    # Deterministic synthetic problem data.
    pred_cost = jax.random.normal(k_cp, (B, D), dtype=jnp.float32)
    true_cost = jax.random.normal(k_c, (B, D), dtype=jnp.float32)
    # Solution pool: binary feasible solutions (as in combinatorial optDataset pools).
    solpool = (jax.random.uniform(k_pool, (P, D)) > 0.5).astype(jnp.float32)
    # True optimal solutions: pick one pool entry per instance; true_obj = <c, w>.
    pick = jax.random.randint(k_pick, (B,), 0, P)
    true_sol = solpool[pick]
    true_obj = jnp.sum(true_cost * true_sol, axis=1)

    loss, sol = spoplus_forward(pred_cost, true_cost, true_sol, true_obj, solpool)
    jax.block_until_ready(loss)
    jax.block_until_ready(sol)

    ref_loss, ref_sol = _reference_numpy(pred_cost, true_cost, true_sol, true_obj, solpool)
    np.testing.assert_allclose(np.asarray(loss), ref_loss, rtol=1e-5, atol=1e-5)
    np.testing.assert_allclose(np.asarray(sol).astype(np.float32), ref_sol,
                               rtol=0, atol=0)

    print("KERNEL_OK")
</pallas_src>

<mosaic_0001>
module attributes {stable_mosaic.version = 11 : i64} {
  func.func @_spoplus_cache_kernel(%arg0: i32, %arg1: memref<16x128xf32, #tpu.memory_space<vmem>>, %arg2: memref<16x128xf32, #tpu.memory_space<vmem>>, %arg3: memref<16x128xf32, #tpu.memory_space<vmem>>, %arg4: memref<128x128xf32, #tpu.memory_space<vmem>>, %arg5: memref<128x128xbf16, #tpu.memory_space<vmem>>, %arg6: memref<16x1xf32, #tpu.memory_space<vmem>>, %arg7: memref<16x128xbf16, #tpu.memory_space<vmem>>) attributes {dimension_semantics = [#tpu.dimension_semantics<parallel>], iteration_bounds = array<i64: 1>, scalar_prefetch = 0 : i64, scratch_operands = 0 : i64, tpu.core_type = #tpu.core_type<tc>, window_params = [{transform_indices = @transform_0, window_bounds = array<i64: 16, 128>}, {transform_indices = @transform_1, window_bounds = array<i64: 16, 128>}, {transform_indices = @transform_2, window_bounds = array<i64: 16, 128>}, {pipeline_mode = #tpu.pipeline_mode<synchronous>, transform_indices = @transform_3, window_bounds = array<i64: 128, 128>}, {pipeline_mode = #tpu.pipeline_mode<synchronous>, transform_indices = @transform_4, window_bounds = array<i64: 128, 128>}, {transform_indices = @transform_5, window_bounds = array<i64: 16, 1>}, {transform_indices = @transform_6, window_bounds = array<i64: 16, 128>}]} {
    %c0 = arith.constant 0 : index
    %c0_0 = arith.constant 0 : index
    %0 = vector.load %arg1[%c0, %c0_0] : memref<16x128xf32, #tpu.memory_space<vmem>>, vector<16x128xf32>
    %c0_1 = arith.constant 0 : index
    %c0_2 = arith.constant 0 : index
    %1 = vector.load %arg2[%c0_1, %c0_2] : memref<16x128xf32, #tpu.memory_space<vmem>>, vector<16x128xf32>
    %c0_3 = arith.constant 0 : index
    %c0_4 = arith.constant 0 : index
    %2 = vector.load %arg3[%c0_3, %c0_4] : memref<16x128xf32, #tpu.memory_space<vmem>>, vector<16x128xf32>
    %cst = arith.constant 2.000000e+00 : f32
    %3 = vector.broadcast %cst : f32 to vector<16x128xf32>
    %4 = arith.mulf %3, %0 : vector<16x128xf32>
    %5 = arith.subf %4, %1 : vector<16x128xf32>
    %c0_5 = arith.constant 0 : index
    %c0_6 = arith.constant 0 : index
    %6 = vector.load %arg4[%c0_5, %c0_6] : memref<128x128xf32, #tpu.memory_space<vmem>>, vector<128x128xf32>
    %cst_7 = arith.constant dense<0.000000e+00> : vector<16x128xf32>
    %7 = tpu.matmul %5, %6, %cst_7 {dimension_numbers = #tpu.dot_dimension_numbers<[1], [0], [0], [1], [0, 0, 1, 1], [], []>} : vector<16x128xf32>, vector<128x128xf32>, vector<16x128xf32> -> vector<16x128xf32>
    %8 = tpu.iota {dimensions = array<i32: 1>} : vector<16x128xi32>
    %c64_i32 = arith.constant 64 : i32
    %9 = vector.broadcast %c64_i32 : i32 to vector<16x128xi32>
    %10 = arith.cmpi slt, %8, %9 : vector<16x128xi32>
    %cst_8 = arith.constant 0x7F800000 : f32
    %11 = vector.broadcast %cst_8 : f32 to vector<16x128xf32>
    %12 = arith.select %10, %7, %11 : vector<16x128xi1>, vector<16x128xf32>
    %cst_9 = arith.constant dense<0x7F800000> : vector<16xf32>
    %13 = vector.multi_reduction <minimumf>, %12, %cst_9 [1] : vector<16x128xf32> to vector<16xf32>
    %14 = vector.shape_cast %13 : vector<16xf32> to vector<16x1xf32>
    %15 = vector.broadcast %14 : vector<16x1xf32> to vector<16x128xf32>
    %16 = arith.cmpf oeq, %12, %15 : vector<16x128xf32>
    %c128_i32 = arith.constant 128 : i32
    %17 = vector.broadcast %c128_i32 : i32 to vector<16x128xi32>
    %18 = arith.select %16, %8, %17 : vector<16x128xi1>, vector<16x128xi32>
    %cst_10 = arith.constant dense<2147483647> : vector<16xi32>
    %19 = vector.multi_reduction <minsi>, %18, %cst_10 [1] : vector<16x128xi32> to vector<16xi32>
    %20 = vector.shape_cast %19 : vector<16xi32> to vector<16x1xi32>
    %21 = vector.broadcast %20 : vector<16x1xi32> to vector<16x128xi32>
    %22 = arith.cmpi eq, %8, %21 : vector<16x128xi32>
    %23 = arith.extui %22 : vector<16x128xi1> to vector<16x128xi32>
    %24 = arith.sitofp %23 : vector<16x128xi32> to vector<16x128xf32>
    %25 = arith.truncf %24 : vector<16x128xf32> to vector<16x128xbf16>
    %c0_11 = arith.constant 0 : index
    %c0_12 = arith.constant 0 : index
    %26 = vector.load %arg5[%c0_11, %c0_12] : memref<128x128xbf16, #tpu.memory_space<vmem>>, vector<128x128xbf16>
    %cst_13 = arith.constant dense<0.000000e+00> : vector<16x128xf32>
    %27 = tpu.matmul %25, %26, %cst_13 {dimension_numbers = #tpu.dot_dimension_numbers<[1], [0], [0], [1], [0, 0, 1, 1], [], []>} : vector<16x128xbf16>, vector<128x128xbf16>, vector<16x128xf32> -> vector<16x128xf32>
    %28 = arith.truncf %27 : vector<16x128xf32> to vector<16x128xbf16>
    %c0_14 = arith.constant 0 : index
    %c0_15 = arith.constant 0 : index
    %29 = vector.load %arg7[%c0_14, %c0_15] : memref<16x128xbf16, #tpu.memory_space<vmem>>, vector<16x128xbf16>
    tpu.vector_store %arg7[%c0_14, %c0_15], %28 {strides = array<i32>} : memref<16x128xbf16, #tpu.memory_space<vmem>>, vector<16x128xbf16>,
    %30 = arith.mulf %5, %27 : vector<16x128xf32>
    %cst_16 = arith.constant dense<0.000000e+00> : vector<16xf32>
    %31 = vector.multi_reduction <add>, %30, %cst_16 [1] : vector<16x128xf32> to vector<16xf32>
    %32 = vector.shape_cast %31 : vector<16xf32> to vector<16x1xf32>
    %33 = arith.mulf %0, %2 : vector<16x128xf32>
    %cst_17 = arith.constant dense<0.000000e+00> : vector<16xf32>
    %34 = vector.multi_reduction <add>, %33, %cst_17 [1] : vector<16x128xf32> to vector<16xf32>
    %35 = vector.shape_cast %34 : vector<16xf32> to vector<16x1xf32>
    %cst_18 = arith.constant 2.000000e+00 : f32
    %36 = vector.broadcast %cst_18 : f32 to vector<16x1xf32>
    %37 = arith.mulf %36, %35 : vector<16x1xf32>
    %38 = arith.subf %37, %32 : vector<16x1xf32>
    %c0_19 = arith.constant 0 : index
    %c0_20 = arith.constant 0 : index
    %39 = vector.load %arg6[%c0_19, %c0_20] : memref<16x1xf32, #tpu.memory_space<vmem>>, vector<16x1xf32>
    tpu.vector_store %arg6[%c0_19, %c0_20], %38 {strides = array<i32>} : memref<16x1xf32, #tpu.memory_space<vmem>>, vector<16x1xf32>,
    return
  }
  func.func @transform_0(%arg0: i32) -> (i32, i32) {
    %c0_i32 = arith.constant 0 : i32
    %c0_i32_0 = arith.constant 0 : i32
    return %arg0, %c0_i32 : i32, i32
  }
  func.func @transform_1(%arg0: i32) -> (i32, i32) {
    %c0_i32 = arith.constant 0 : i32
    %c0_i32_0 = arith.constant 0 : i32
    return %arg0, %c0_i32 : i32, i32
  }
  func.func @transform_2(%arg0: i32) -> (i32, i32) {
    %c0_i32 = arith.constant 0 : i32
    %c0_i32_0 = arith.constant 0 : i32
    return %arg0, %c0_i32 : i32, i32
  }
  func.func @transform_3(%arg0: i32) -> (i32, i32) {
    %c0_i32 = arith.constant 0 : i32
    %c0_i32_0 = arith.constant 0 : i32
    %c0_i32_1 = arith.constant 0 : i32
    return %c0_i32, %c0_i32_0 : i32, i32
  }
  func.func @transform_4(%arg0: i32) -> (i32, i32) {
    %c0_i32 = arith.constant 0 : i32
    %c0_i32_0 = arith.constant 0 : i32
    %c0_i32_1 = arith.constant 0 : i32
    return %c0_i32, %c0_i32_0 : i32, i32
  }
  func.func @transform_5(%arg0: i32) -> (i32, i32) {
    %c0_i32 = arith.constant 0 : i32
    %c0_i32_0 = arith.constant 0 : i32
    return %arg0, %c0_i32 : i32, i32
  }
  func.func @transform_6(%arg0: i32) -> (i32, i32) {
    %c0_i32 = arith.constant 0 : i32
    %c0_i32_0 = arith.constant 0 : i32
    return %arg0, %c0_i32 : i32, i32
  }
}

</mosaic_0001>

<llo_original>
// kernel: sub.1
$region0: #{sub.1}
  #allocation2 [shape = 's32[1]{0}', space=sflag, size = 0x4, scoped, tag = 'scoped memory for sub.1']
  %s0 = inlined_call_operand.vmem [shape: f32[8], index: 0, kind: input, shape index: {}]
  %s1 = inlined_call_operand.vmem [shape: f32[8], index: 1, kind: input, shape index: {}]
  %s2 = inlined_call_operand.hbm [shape: f32[8], index: 2, kind: output, shape index: {}]
  $region1: #{sub.1} parent=0
    #allocation0 [shape = 'u8[512]{0}', space=vmem, size = 0x400, scoped, tag = 'operand span for operand 2']
    #allocation1 [shape = 's32[1]{0}', space=sflag, size = 0x4, scoped, tag = 'scoped memory for sub.1']
    %3 = vsyncpa [#allocation1], 0
    %v4 = vld [vmem:[%s0] sm:$0x1]
    %v5 = vld [vmem:[%s1] sm:$0x1]
    %6 = xla_tuple %v4, %v5
    %7 = xla_tuple %6
    %v8 = vsub.f32 %v4, %v5
    %9 = xla_tuple %v8
    %10 = vst [vmem:[#allocation0] sm:$0x1] %v8
    %s12 = ssub.s32 16, 16
    %13 = vsyncadd [#allocation1], %s12
    %s15 = sshll.u32 [#allocation0], 4
    %s16 = int_to_ptr.vmem [resolvable:$true] %s15
    %18 = dma.vmem_to_hbm [thread:$0]  %s16, 16, %s2, [#allocation1]
    %19 = dma.done [#allocation1], 16
    %20 = vsyncpa [#allocation1], 1

// kernel: spoplus_forward.1
$region0: #{spoplus_forward.1}
  #allocation0 [shape = 'u32[]', space=smem, size = 0x4, offset = 0x4, fixed_abs, tag = 'smem constant byte address 0x4 - core index']
  #allocation1 [shape = 'u32[144,128]{1,0:T(1,128)}', space=vmem, size = 0x12000, scoped, tag = 'internal scratch']
  %s0 = inlined_call_operand.vmem [shape: f32[16,128], index: 0, kind: input, shape index: {}]
  %s1 = inlined_call_operand.vmem [shape: f32[16,128], index: 1, kind: input, shape index: {}]
  %s2 = inlined_call_operand.vmem [shape: f32[16,128], index: 2, kind: input, shape index: {}]
  %s3 = inlined_call_operand.vmem [shape: f32[128,128], index: 3, kind: input, shape index: {}]
  %s4 = inlined_call_operand.vmem [shape: bf16[128,128], index: 4, kind: input, shape index: {}]
  %s5 = inlined_call_operand.vmem [shape: f32[16,1], index: 5, kind: output, shape index: {0}]
  %s6 = inlined_call_operand.vmem [shape: bf16[16,128], index: 6, kind: output, shape index: {1}]
  %7 = xla_tuple %s5, %s6
  %s8 = sld [smem:[#allocation0]]
  $region38: #{spoplus_forward.1} parent=0
    _
  %s10 = ssub.s32 1, %s8
  %s11 = scalar_select 0, %s10, %s8
  // Predicated region
  $region2: #{spoplus_forward.1} parent=0 // pred_check
    _
  $region3: #{spoplus_forward.1} parent=0 // pred_check_branch
    %13 = sbr.rel (0) target = $region5
  $region4: #{spoplus_forward.1} parent=0 // pred_region
    _
  $region5: #{spoplus_forward.1} parent=0 // pred_fallthru
    _
  // Predicated region
  $region6: #{spoplus_forward.1} parent=0 // pred_check
    _
  $region7: #{spoplus_forward.1} parent=0 // pred_check_branch
    %15 = sbr.rel (0) target = $region9
  $region8: #{spoplus_forward.1} parent=0 // pred_region
    _
  $region9: #{spoplus_forward.1} parent=0 // pred_fallthru
    _
  // Predicated region
  $region10: #{spoplus_forward.1} parent=0 // pred_check
    _
  $region11: #{spoplus_forward.1} parent=0 // pred_check_branch
    %17 = sbr.rel (0) target = $region13
  $region12: #{spoplus_forward.1} parent=0 // pred_region
    _
  $region13: #{spoplus_forward.1} parent=0 // pred_fallthru
    _
  // Predicated region
  $region14: #{spoplus_forward.1} parent=0 // pred_check
    _
  $region15: #{spoplus_forward.1} parent=0 // pred_check_branch
    %19 = sbr.rel (0) target = $region17
  $region16: #{spoplus_forward.1} parent=0 // pred_region
    _
  $region17: #{spoplus_forward.1} parent=0 // pred_fallthru
    _
  // Predicated region
  $region18: #{spoplus_forward.1} parent=0 // pred_check
    _
  $region19: #{spoplus_forward.1} parent=0 // pred_check_branch
    %21 = sbr.rel (0) target = $region21
  $region20: #{spoplus_forward.1} parent=0 // pred_region
    _
  $region21: #{spoplus_forward.1} parent=0 // pred_fallthru
    _
  %v23 = vld [vmem:[%s0] sm:$0xff]
  %v24 = vld [vmem:[%s0 + $0x8] sm:$0xff]
  %v25 = vld [vmem:[%s1] sm:$0xff]
  %v26 = vld [vmem:[%s1 + $0x8] sm:$0xff]
  %v27 = vld [vmem:[%s2] sm:$0xff]
  %v28 = vld [vmem:[%s2 + $0x8] sm:$0xff]
  %v29 = vmul.f32 %v23, 2.0
  %v30 = vmul.f32 %v24, 2.0
  %v31 = vsub.f32 %v29, %v25
  %v32 = vsub.f32 %v30, %v26
  %v33 = vld [vmem:[%s3] sm:$0xff]
  %v34 = vld [vmem:[%s3 + $0x8] sm:$0xff]
  %v35 = vld [vmem:[%s3 + $0x10] sm:$0xff]
  %v36 = vld [vmem:[%s3 + $0x18] sm:$0xff]
  %v37 = vld [vmem:[%s3 + $0x20] sm:$0xff]
  %v38 = vld [vmem:[%s3 + $0x28] sm:$0xff]
  %v39 = vld [vmem:[%s3 + $0x30] sm:$0xff]
  %v40 = vld [vmem:[%s3 + $0x38] sm:$0xff]
  %v41 = vld [vmem:[%s3 + $0x40] sm:$0xff]
  %v42 = vld [vmem:[%s3 + $0x48] sm:$0xff]
  %v43 = vld [vmem:[%s3 + $0x50] sm:$0xff]
  %v44 = vld [vmem:[%s3 + $0x58] sm:$0xff]
  %v45 = vld [vmem:[%s3 + $0x60] sm:$0xff]
  %v46 = vld [vmem:[%s3 + $0x68] sm:$0xff]
  %v47 = vld [vmem:[%s3 + $0x70] sm:$0xff]
  %v48 = vld [vmem:[%s3 + $0x78] sm:$0xff]
  %49 = vmatprep.subr.mxu0 0.0
  %50 = vmatpush1.msra.mxu0 %v33
  %51 = vmatprep.subr.mxu0 0.0
  %52 = vmatpush1.msra.mxu0 %v34
  %53 = vmatprep.subr.mxu0 0.0
  %54 = vmatpush1.msra.mxu0 %v35
  %55 = vmatprep.subr.mxu0 0.0
  %56 = vmatpush1.msra.mxu0 %v36
  %57 = vmatprep.subr.mxu0 0.0
  %58 = vmatpush1.msra.mxu0 %v37
  %59 = vmatprep.subr.mxu0 0.0
  %60 = vmatpush1.msra.mxu0 %v38
  %61 = vmatprep.subr.mxu0 0.0
  %62 = vmatpush1.msra.mxu0 %v39
  %63 = vmatprep.subr.mxu0 0.0
  %64 = vmatpush1.msra.mxu0 %v40
  %65 = vmatprep.subr.mxu0 0.0
  %66 = vmatpush1.msra.mxu0 %v41
  %67 = vmatprep.subr.mxu0 0.0
  %68 = vmatpush1.msra.mxu0 %v42
  %69 = vmatprep.subr.mxu0 0.0
  %70 = vmatpush1.msra.mxu0 %v43
  %71 = vmatprep.subr.mxu0 0.0
  %72 = vmatpush1.msra.mxu0 %v44
  %73 = vmatprep.subr.mxu0 0.0
  %74 = vmatpush1.msra.mxu0 %v45
  %75 = vmatprep.subr.mxu0 0.0
  %76 = vmatpush1.msra.mxu0 %v46
  %77 = vmatprep.subr.mxu0 0.0
  %78 = vmatpush1.msra.mxu0 %v47
  %79 = vmatprep.subr.mxu0 0.0
  %80 = vmatpush1.msra.mxu0 %v48
  %81 = vmatprep.subr.mxu0 0.0
  %82 = vmatpush1.msra.mxu0 0.0
  %83 = vmatprep.subr.mxu0 0.0
  %84 = vmatpush1.msra.mxu0 0.0
  %85 = vmatprep.subr.mxu0 0.0
  %86 = vmatpush1.msra.mxu0 0.0
  %87 = vmatprep.subr.mxu0 0.0
  %88 = vmatpush1.msra.mxu0 0.0
  %89 = vmatprep.subr.mxu0 0.0
  %90 = vmatpush1.msra.mxu0 0.0
  %91 = vmatprep.subr.mxu0 0.0
  %92 = vmatpush1.msra.mxu0 0.0
  %93 = vmatprep.subr.mxu0 0.0
  %94 = vmatpush1.msra.mxu0 0.0
  %95 = vmatprep.subr.mxu0 0.0
  %96 = vmatpush1.msra.mxu0 0.0
  %97 = vmatprep.subr.mxu0 0.0
  %98 = vmatpush1.msra.mxu0 0.0
  %99 = vmatprep.subr.mxu0 0.0
  %100 = vmatpush1.msra.mxu0 0.0
  %101 = vmatprep.subr.mxu0 0.0
  %102 = vmatpush1.msra.mxu0 0.0
  %103 = vmatprep.subr.mxu0 0.0
  %104 = vmatpush1.msra.mxu0 0.0
  %105 = vmatprep.subr.mxu0 0.0
  %106 = vmatpush1.msra.mxu0 0.0
  %107 = vmatprep.subr.mxu0 0.0
  %108 = vmatpush1.msra.mxu0 0.0
  %109 = vmatprep.subr.mxu0 0.0
  %110 = vmatpush1.msra.mxu0 0.0
  %111 = vmatprep.subr.mxu0 0.0
  %112 = vmatpush1.msra.mxu0 0.0
  %113 = vmatprep.mubr.f32.mxu0 0.0
  %114 = vmatmul.mubr.f32.gmra.mrb[0].mxu0 %v31
  %v115 = vpop.f32.mrb[0].mxu0
  %v116 = vadd.f32 0.0, %v115
  %v117 = vpop.f32.mrb[0].mxu0
  %118 = vmatprep.mubr.f32.mxu0 0.0
  %119 = vmatmul.mubr.f32.gmra.mrb[0].mxu0 %v32
  %v120 = vpop.f32.mrb[0].mxu0
  %v121 = vadd.f32 0.0, %v120
  %v122 = vpop.f32.mrb[0].mxu0
  %123 = vdwg.mxu0
  %v124 = vlaneseq
  %v125 = vand.u32 %v124, 127
  %vm126 = vcmp.lt.s32.totalorder %v125, 64
  %v127 = vsel %vm126, %v116, inf
  %v128 = vsel %vm126, %v121, inf
  %129 = vmin.xlane.f32.xlu0 %v127
  %v130 = vpop.xlane.xlu0 %129
  %131 = vmin.xlane.f32.xlu0 %v128
  %v132 = vpop.xlane.xlu0 %131
  %vm133 = vcmp.eq.f32.partialorder %v127, %v130
  %vm134 = vcmp.eq.f32.partialorder %v128, %v132
  %v135 = vsel %vm133, %v125, 128
  %v136 = vsel %vm134, %v125, 128
  %v137 = vand.u32 %v135, 65535
  %v138 = vshra.s32 %v135, 16
  %v139 = vcvt.s32.f32 %v137
  %v140 = vcvt.s32.f32 %v138
  %141 = vmin.xlane.f32.xlu0 %v140
  %v142 = vpop.xlane.xlu0 %141
  %vm143 = vcmp.eq.f32.partialorder %v140, %v142
  %v144 = vsel %vm143, %v139, inf
  %145 = vmin.xlane.f32.xlu0 %v144
  %v146 = vpop.xlane.xlu0 %145
  %v147 = vcvt.f32.s32 %v146
  %v148 = vcvt.f32.s32 %v142
  %v149 = vshll.u32 %v148, 16
  %v150 = vadd.s32 %v149, %v147
  %v151 = vand.u32 %v136, 65535
  %v152 = vshra.s32 %v136, 16
  %v153 = vcvt.s32.f32 %v151
  %v154 = vcvt.s32.f32 %v152
  %155 = vmin.xlane.f32.xlu0 %v154
  %v156 = vpop.xlane.xlu0 %155
  %vm157 = vcmp.eq.f32.partialorder %v154, %v156
  %v158 = vsel %vm157, %v153, inf
  %159 = vmin.xlane.f32.xlu0 %v158
  %v160 = vpop.xlane.xlu0 %159
  %v161 = vcvt.f32.s32 %v160
  %v162 = vcvt.f32.s32 %v156
  %v163 = vshll.u32 %v162, 16
  %v164 = vadd.s32 %v163, %v161
  %vm165 = vcmp.eq.s32.totalorder %v125, %v150
  %vm166 = vcmp.eq.s32.totalorder %v125, %v164
  %v167 = vsel %vm165, 1, 0
  %v168 = vsel %vm166, 1, 0
  %v169 = vcvt.s32.f32 %v167
  %v170 = vcvt.s32.f32 %v168
  %v171 = vpack.c.bf16 %v170, %v169
  %v172 = vld [vmem:[%s4] sm:$0xf]
  %v173 = vld [vmem:[%s4 + $0x4] sm:$0xf]
  %v174 = vld [vmem:[%s4 + $0x8] sm:$0xf]
  %v175 = vld [vmem:[%s4 + $0xc] sm:$0xf]
  %v176 = vld [vmem:[%s4 + $0x10] sm:$0xf]
  %v177 = vld [vmem:[%s4 + $0x14] sm:$0xf]
  %v178 = vld [vmem:[%s4 + $0x18] sm:$0xf]
  %v179 = vld [vmem:[%s4 + $0x1c] sm:$0xf]
  %v180 = vld [vmem:[%s4 + $0x20] sm:$0xf]
  %v181 = vld [vmem:[%s4 + $0x24] sm:$0xf]
  %v182 = vld [vmem:[%s4 + $0x28] sm:$0xf]
  %v183 = vld [vmem:[%s4 + $0x2c] sm:$0xf]
  %v184 = vld [vmem:[%s4 + $0x30] sm:$0xf]
  %v185 = vld [vmem:[%s4 + $0x34] sm:$0xf]
  %v186 = vld [vmem:[%s4 + $0x38] sm:$0xf]
  %v187 = vld [vmem:[%s4 + $0x3c] sm:$0xf]
  %v204 = vunpack.c.l.b16 %v172
  %v205 = vunpack.c.l.b16 %v173
  %v206 = vunpack.c.l.b16 %v174
  %v207 = vunpack.c.l.b16 %v175
  %v208 = vunpack.c.l.b16 %v176
  %v209 = vunpack.c.l.b16 %v177
  %v210 = vunpack.c.l.b16 %v178
  %v211 = vunpack.c.l.b16 %v179
  %v212 = vunpack.c.l.b16 %v180
  %v213 = vunpack.c.l.b16 %v181
  %v214 = vunpack.c.l.b16 %v182
  %v215 = vunpack.c.l.b16 %v183
  %v216 = vunpack.c.l.b16 %v184
  %v217 = vunpack.c.l.b16 %v185
  %v218 = vunpack.c.l.b16 %v186
  %v219 = vunpack.c.l.b16 %v187
  %v220 = vpack.c.b16 %v205, %v204
  %v221 = vpack.c.b16 %v207, %v206
  %v222 = vpack.c.b16 %v209, %v208
  %v223 = vpack.c.b16 %v211, %v210
  %v224 = vpack.c.b16 %v213, %v212
  %v225 = vpack.c.b16 %v215, %v214
  %v226 = vpack.c.b16 %v217, %v216
  %v227 = vpack.c.b16 %v219, %v218
  %236 = vmatprep.subr.bf16.mxu0 0
  %237 = vmatpush1.bf16.msra.mxu0 %v220
  %238 = vmatprep.subr.bf16.mxu0 0
  %239 = vmatpush1.bf16.msra.mxu0 %v221
  %240 = vmatprep.subr.bf16.mxu0 0
  %241 = vmatpush1.bf16.msra.mxu0 %v222
  %242 = vmatprep.subr.bf16.mxu0 0
  %243 = vmatpush1.bf16.msra.mxu0 %v223
  %244 = vmatprep.subr.bf16.mxu0 0
  %245 = vmatpush1.bf16.msra.mxu0 %v224
  %246 = vmatprep.subr.bf16.mxu0 0
  %247 = vmatpush1.bf16.msra.mxu0 %v225
  %248 = vmatprep.subr.bf16.mxu0 0
  %249 = vmatpush1.bf16.msra.mxu0 %v226
  %250 = vmatprep.subr.bf16.mxu0 0
  %251 = vmatpush1.bf16.msra.mxu0 %v227
  %252 = vmatprep.subr.bf16.mxu0 0
  %253 = vmatpush1.bf16.msra.mxu0 0
  %254 = vmatprep.subr.bf16.mxu0 0
  %255 = vmatpush1.bf16.msra.mxu0 0
  %256 = vmatprep.subr.bf16.mxu0 0
  %257 = vmatpush1.bf16.msra.mxu0 0
  %258 = vmatprep.subr.bf16.mxu0 0
  %259 = vmatpush1.bf16.msra.mxu0 0
  %260 = vmatprep.subr.bf16.mxu0 0
  %261 = vmatpush1.bf16.msra.mxu0 0
  %262 = vmatprep.subr.bf16.mxu0 0
  %263 = vmatpush1.bf16.msra.mxu0 0
  %264 = vmatprep.subr.bf16.mxu0 0
  %265 = vmatpush1.bf16.msra.mxu0 0
  %266 = vmatprep.subr.bf16.mxu0 0
  %267 = vmatpush1.bf16.msra.mxu0 0
  %268 = vmatprep.mubr.bf16.mxu0 0
  %269 = vmatmul.mubr.bf16.gmra.mrb[0].mxu0 %v171
  %v270 = vpop.f32.mrb[0].mxu0
  %v271 = vadd.f32 0.0, %v270
  %v272 = vpop.f32.mrb[0].mxu0
  %v273 = vpop.f32.mrb[0].mxu0
  %v274 = vadd.f32 0.0, %v273
  %v275 = vpop.f32.mrb[0].mxu0
  %276 = vdwg.mxu0
  %v277 = vpack.c.bf16 %v274, %v271
  %v279 = vunpack.c.l.b16 %v277
  %v280 = vunpack.c.h.b16 %v277
  %v281 = vpack.c.b16 %v279, %v279
  %v282 = vpack.c.b16 %v280, %v280
  %285 = vst [vmem:[%s6] sm:$0xf] %v281
  %286 = vst [vmem:[%s6 + $0x4] sm:$0xf] %v282
  %v287 = vmul.f32 %v31, %v271
  %v288 = vmul.f32 %v32, %v274
  %289 = vadd.xlane.f32.xlu0 %v287
  %v290 = vpop.xlane.xlu0 %289
  %291 = vadd.xlane.f32.xlu0 %v288
  %v292 = vpop.xlane.xlu0 %291
  %v293 = vmul.f32 %v23, %v27
  %v294 = vmul.f32 %v24, %v28
  %295 = vadd.xlane.f32.xlu0 %v293
  %v296 = vpop.xlane.xlu0 %295
  %297 = vadd.xlane.f32.xlu0 %v294
  %v298 = vpop.xlane.xlu0 %297
  %v299 = vmul.f32 %v296, 2.0
  %v300 = vmul.f32 %v298, 2.0
  %v301 = vsub.f32 %v299, %v290
  %v302 = vsub.f32 %v300, %v292
  %vm303 = vcmask 7168
  %304 = vst.msk [vmem:[%s5] sm:$0xff] %vm303, %v301
  %305 = vst.msk [vmem:[%s5 + $0x8] sm:$0xff] %vm303, %v302
  // Predicated region
  $region22: #{spoplus_forward.1} parent=0 // pred_check
    _
  $region23: #{spoplus_forward.1} parent=0 // pred_check_branch
    %307 = sbr.rel (0) target = $region25
  $region24: #{spoplus_forward.1} parent=0 // pred_region
    _
  $region25: #{spoplus_forward.1} parent=0 // pred_fallthru
    _
  // Predicated region
  $region26: #{spoplus_forward.1} parent=0 // pred_check
    _
  $region27: #{spoplus_forward.1} parent=0 // pred_check_branch
    %309 = sbr.rel (0) target = $region29
  $region28: #{spoplus_forward.1} parent=0 // pred_region
    _
  $region29: #{spoplus_forward.1} parent=0 // pred_fallthru
    _
  // Predicated region
  $region30: #{spoplus_forward.1} parent=0 // pred_check
    _
  $region31: #{spoplus_forward.1} parent=0 // pred_check_branch
    %311 = sbr.rel (0) target = $region33
  $region32: #{spoplus_forward.1} parent=0 // pred_region
    _
  $region33: #{spoplus_forward.1} parent=0 // pred_fallthru
    _
  // Predicated region
  $region34: #{spoplus_forward.1} parent=0 // pred_check
    _
  $region35: #{spoplus_forward.1} parent=0 // pred_check_branch
    %313 = sbr.rel (0) target = $region37
  $region36: #{spoplus_forward.1} parent=0 // pred_region
    _
  $region37: #{spoplus_forward.1} parent=0 // pred_fallthru
    _

</llo_original>
